<compile_context>
chip_gen: v7x
topology: tpu7x:2x2x1
jax: 0.10.0
libtpu: 0.0.40
codegen_flags: <defaults>
</compile_context>

<pallas_src>
import functools

import jax
import jax.numpy as jnp
from jax import lax
from jax.experimental import pallas as pl
from jax.experimental.pallas import tpu as pltpu


def _classifier_kernel(x_ref, w_ref, b_ref, out_ref, *, use_bf16_matmul):
    # x_ref:   (B, T, F)  full feature tensor (block == full array)
    # w_ref:   (C, F)     full weight, PyTorch layout (no transpose in wrapper)
    # b_ref:   (1, C)     bias
    # out_ref: (2, B, C)  out_ref[0] = log(avg softmax), out_ref[1] = avg softmax
    B, T, F = x_ref.shape
    C = w_ref.shape[0]

    # TODO(synk): nn.Dropout is identity in eval mode; training-mode dropout
    # (Bernoulli mask + 1/(1-p) scaling) is not applied here.

    x = x_ref[...].reshape(B * T, F)      # one (B*T, F) matmul instead of B small ones
    w = w_ref[...]                        # (C, F)
    if use_bf16_matmul:
        # Halves feature HBM/VMEM traffic on v6e/v7x; accumulation stays f32.
        x = x.astype(jnp.bfloat16)
        w = w.astype(jnp.bfloat16)

    # logits = x @ W^T + b, with W kept in its (C, F) layout (contract on F).
    logits = lax.dot_general(
        x, w, dimension_numbers=(((1,), (1,)), ((), ())),
        preferred_element_type=jnp.float32) + b_ref[...]          # (B*T, C)

    # Numerically-stable softmax over the class axis, all in f32.
    m = jnp.max(logits, axis=-1, keepdims=True)
    e = jnp.exp(logits - m)
    denom = jnp.sum(e, axis=-1, keepdims=True)
    # Fold the 1/T of the time-mean into the softmax reciprocal (EUP slot).
    inv = pl.reciprocal(denom * jnp.float32(T), approx=True)      # 1 / (sum_c * T)
    sm_over_t = e * inv                                           # softmax / T

    # mean over T == sum over T of (softmax / T).  Block T == full T, so no
    # padded sublane rows can leak into the reduction.
    avg = jnp.sum(sm_over_t.reshape(B, T, C), axis=1)             # (B, C)

    out_ref[0] = jnp.log(avg).astype(out_ref.dtype)
    out_ref[1] = avg.astype(out_ref.dtype)


def linear_classifier_forward(feature, weight, bias, *, use_bf16_matmul=False):
    """feature: (B, T, F) f32; weight: (C, F) f32 (PyTorch layout); bias: (C,)."""
    B, T, F = feature.shape
    C = weight.shape[0]
    b2 = bias.reshape(1, C)

    kernel = functools.partial(_classifier_kernel, use_bf16_matmul=use_bf16_matmul)

    out = pl.pallas_call(
        kernel,
        out_shape=jax.ShapeDtypeStruct((2, B, C), jnp.float32),
        grid_spec=pltpu.PrefetchScalarGridSpec(
            num_scalar_prefetch=0,
            grid=(1,),                                    # whole problem in one step
            in_specs=[
                pl.BlockSpec((B, T, F), lambda i: (0, 0, 0)),   # full feature
                pl.BlockSpec((C, F), lambda i: (0, 0)),         # full weight (C, F)
                pl.BlockSpec((1, C), lambda i: (0, 0)),         # bias
            ],
            out_specs=pl.BlockSpec((2, B, C), lambda i: (0, 0, 0)),  # single writeback
        ),
        compiler_params=pltpu.CompilerParams(
            dimension_semantics=("arbitrary",)),
    )(feature, weight, b2)

    return out[0], out[1]    # (log_softmax-of-avg, avg), each (B, C)


def _reference(feature, weight, bias):
    B, T, F = feature.shape
    logits = feature.reshape(B * T, F) @ weight.T + bias
    sm = jax.nn.softmax(logits, axis=1).reshape(B, T, -1)
    avg = sm.mean(axis=1)
    return jnp.log(avg), avg


if __name__ == "__main__":
    # Module hyper-params (small, consistent with the forward pass):
    batch_size, seq_len, input_dim, num_classes = 2, 8, 32, 16
    key = jax.random.PRNGKey(0)
    k_x, k_w, k_b = jax.random.split(key, 3)

    feature = jax.random.normal(k_x, (batch_size, seq_len, input_dim), dtype=jnp.float32)
    # Deterministic init mimicking nn.Linear's uniform(-1/sqrt(F), 1/sqrt(F)).
    bound = 1.0 / jnp.sqrt(jnp.float32(input_dim))
    weight = jax.random.uniform(k_w, (num_classes, input_dim), jnp.float32, -bound, bound)
    bias = jax.random.uniform(k_b, (num_classes,), jnp.float32, -bound, bound)

    log_sm, avg = linear_classifier_forward(feature, weight, bias)
    jax.block_until_ready((log_sm, avg))

    ref_log_sm, ref_avg = _reference(feature, weight, bias)
    # approx=True reciprocal (EUP) carries a small relative error; tolerance set
    # accordingly (the exact/f32 path matches the reference to ~1e-6).
    assert jnp.allclose(avg, ref_avg, atol=2e-3, rtol=2e-3)
    assert jnp.allclose(log_sm, ref_log_sm, atol=2e-3, rtol=2e-3)

    print("KERNEL_OK")
</pallas_src>

<mosaic_0001>
module attributes {stable_mosaic.version = 11 : i64} {
  func.func @_classifier_kernel(%arg0: i32, %arg1: memref<2x8x32xf32, #tpu.memory_space<vmem>>, %arg2: memref<16x32xf32, #tpu.memory_space<vmem>>, %arg3: memref<1x16xf32, #tpu.memory_space<vmem>>, %arg4: memref<2x2x16xf32, #tpu.memory_space<vmem>>) attributes {dimension_semantics = [#tpu.dimension_semantics<arbitrary>], iteration_bounds = array<i64: 1>, scalar_prefetch = 0 : i64, scratch_operands = 0 : i64, tpu.core_type = #tpu.core_type<tc>, window_params = [{pipeline_mode = #tpu.pipeline_mode<synchronous>, transform_indices = @transform_0, window_bounds = array<i64: 2, 8, 32>}, {pipeline_mode = #tpu.pipeline_mode<synchronous>, transform_indices = @transform_1, window_bounds = array<i64: 16, 32>}, {pipeline_mode = #tpu.pipeline_mode<synchronous>, transform_indices = @transform_2, window_bounds = array<i64: 1, 16>}, {pipeline_mode = #tpu.pipeline_mode<synchronous>, transform_indices = @transform_3, window_bounds = array<i64: 2, 2, 16>}]} {
    %c0 = arith.constant 0 : index
    %c0_0 = arith.constant 0 : index
    %c0_1 = arith.constant 0 : index
    %0 = vector.load %arg1[%c0, %c0_0, %c0_1] : memref<2x8x32xf32, #tpu.memory_space<vmem>>, vector<2x8x32xf32>
    %1 = vector.shape_cast %0 : vector<2x8x32xf32> to vector<16x32xf32>
    %c0_2 = arith.constant 0 : index
    %c0_3 = arith.constant 0 : index
    %2 = vector.load %arg2[%c0_2, %c0_3] : memref<16x32xf32, #tpu.memory_space<vmem>>, vector<16x32xf32>
    %cst = arith.constant dense<0.000000e+00> : vector<16x16xf32>
    %3 = tpu.matmul %1, %2, %cst {dimension_numbers = #tpu.dot_dimension_numbers<[1], [1], [0], [0], [0, 0, 1, 0], [], []>} : vector<16x32xf32>, vector<16x32xf32>, vector<16x16xf32> -> vector<16x16xf32>
    %c0_4 = arith.constant 0 : index
    %c0_5 = arith.constant 0 : index
    %4 = vector.load %arg3[%c0_4, %c0_5] : memref<1x16xf32, #tpu.memory_space<vmem>>, vector<1x16xf32>
    %5 = vector.broadcast %4 : vector<1x16xf32> to vector<16x16xf32>
    %6 = arith.addf %3, %5 : vector<16x16xf32>
    %cst_6 = arith.constant dense<0xFF800000> : vector<16xf32>
    %7 = vector.multi_reduction <maximumf>, %6, %cst_6 [1] : vector<16x16xf32> to vector<16xf32>
    %8 = vector.shape_cast %7 : vector<16xf32> to vector<16x1xf32>
    %9 = vector.broadcast %8 : vector<16x1xf32> to vector<16x16xf32>
    %10 = arith.subf %6, %9 : vector<16x16xf32>
    %11 = math.exp %10 : vector<16x16xf32>
    %cst_7 = arith.constant dense<0.000000e+00> : vector<16xf32>
    %12 = vector.multi_reduction <add>, %11, %cst_7 [1] : vector<16x16xf32> to vector<16xf32>
    %13 = vector.shape_cast %12 : vector<16xf32> to vector<16x1xf32>
    %cst_8 = arith.constant 8.000000e+00 : f32
    %14 = vector.broadcast %cst_8 : f32 to vector<16x1xf32>
    %15 = arith.mulf %13, %14 : vector<16x1xf32>
    %16 = tpu.reciprocal %15 {approx = true} : vector<16x1xf32> -> vector<16x1xf32>
    %17 = vector.broadcast %16 : vector<16x1xf32> to vector<16x16xf32>
    %18 = arith.mulf %11, %17 : vector<16x16xf32>
    %19 = vector.shape_cast %18 : vector<16x16xf32> to vector<2x8x16xf32>
    %cst_9 = arith.constant dense<0.000000e+00> : vector<2x16xf32>
    %20 = vector.multi_reduction <add>, %19, %cst_9 [1] : vector<2x8x16xf32> to vector<2x16xf32>
    %21 = math.log %20 : vector<2x16xf32>
    %c0_10 = arith.constant 0 : index
    %c0_11 = arith.constant 0 : index
    %c0_12 = arith.constant 0 : index
    %22 = vector.load %arg4[%c0_10, %c0_11, %c0_12] : memref<2x2x16xf32, #tpu.memory_space<vmem>>, vector<1x2x16xf32>
    %23 = vector.shape_cast %22 : vector<1x2x16xf32> to vector<2x16xf32>
    %24 = vector.shape_cast %21 : vector<2x16xf32> to vector<1x2x16xf32>
    tpu.vector_store %arg4[%c0_10, %c0_11, %c0_12], %24 {strides = array<i32>} : memref<2x2x16xf32, #tpu.memory_space<vmem>>, vector<1x2x16xf32>,
    %c1 = arith.constant 1 : index
    %c0_13 = arith.constant 0 : index
    %c0_14 = arith.constant 0 : index
    %25 = vector.load %arg4[%c1, %c0_13, %c0_14] : memref<2x2x16xf32, #tpu.memory_space<vmem>>, vector<1x2x16xf32>
    %26 = vector.shape_cast %25 : vector<1x2x16xf32> to vector<2x16xf32>
    %27 = vector.shape_cast %20 : vector<2x16xf32> to vector<1x2x16xf32>
    tpu.vector_store %arg4[%c1, %c0_13, %c0_14], %27 {strides = array<i32>} : memref<2x2x16xf32, #tpu.memory_space<vmem>>, vector<1x2x16xf32>,
    return
  }
  func.func @transform_0(%arg0: i32) -> (i32, i32, i32) {
    %c0_i32 = arith.constant 0 : i32
    %c0_i32_0 = arith.constant 0 : i32
    %c0_i32_1 = arith.constant 0 : i32
    %c0_i32_2 = arith.constant 0 : i32
    return %c0_i32, %c0_i32_0, %c0_i32_1 : i32, i32, i32
  }
  func.func @transform_1(%arg0: i32) -> (i32, i32) {
    %c0_i32 = arith.constant 0 : i32
    %c0_i32_0 = arith.constant 0 : i32
    %c0_i32_1 = arith.constant 0 : i32
    return %c0_i32, %c0_i32_0 : i32, i32
  }
  func.func @transform_2(%arg0: i32) -> (i32, i32) {
    %c0_i32 = arith.constant 0 : i32
    %c0_i32_0 = arith.constant 0 : i32
    %c0_i32_1 = arith.constant 0 : i32
    return %c0_i32, %c0_i32_0 : i32, i32
  }
  func.func @transform_3(%arg0: i32) -> (i32, i32, i32) {
    %c0_i32 = arith.constant 0 : i32
    %c0_i32_0 = arith.constant 0 : i32
    %c0_i32_1 = arith.constant 0 : i32
    %c0_i32_2 = arith.constant 0 : i32
    return %c0_i32, %c0_i32_0, %c0_i32_1 : i32, i32, i32
  }
}

</mosaic_0001>

<llo_original>
// kernel: tpu_custom_call.1
$region0: #{tpu_custom_call.1}
  #allocation0 [shape = 'u32[]', space=smem, size = 0x4, offset = 0x4, fixed_abs, tag = 'smem constant byte address 0x4 - core index']
  #allocation1 [shape = 'u32[144,128]{1,0:T(1,128)}', space=vmem, size = 0x12000, scoped, tag = 'internal scratch']
  %s0 = inlined_call_operand.hbm [shape: f32[2,8,32], index: 0, kind: input, shape index: {}]
  %s1 = inlined_call_operand.hbm [shape: f32[16,32], index: 1, kind: input, shape index: {}]
  %s2 = inlined_call_operand.vmem [shape: f32[1,16], index: 2, kind: input, shape index: {}]
  %s3 = inlined_call_operand.hbm [shape: f32[2,2,16], index: 3, kind: output, shape index: {}]
  %s4 = sld [smem:[#allocation0]]
  $region30: #{tpu_custom_call.1} parent=0
    _
  %s6 = ssub.s32 1, %s4
  %s7 = scalar_select 0, %s6, %s4
  $region1: #{tpu_custom_call.1} parent=0
    #allocation2 [shape = 'u8[8192]{0}', space=vmem, size = 0x2000, scoped, tag = 'input window, operand 0, single buffered']
    #allocation3 [shape = 's32[1]{0}', space=sflag, size = 0x4, scoped, tag = 'scoped memory for tpu_custom_call.1']
    #allocation4 [shape = 's32[1]{0}', space=sflag, size = 0x4, scoped, tag = 'scoped memory for tpu_custom_call.1']
    #allocation5 [shape = 'u8[8192]{0}', space=vmem, size = 0x2000, scoped, tag = 'input window, operand 1, single buffered']
    #allocation6 [shape = 's32[1]{0}', space=sflag, size = 0x4, scoped, tag = 'scoped memory for tpu_custom_call.1']
    #allocation7 [shape = 'u8[2048]{0}', space=vmem, size = 0x800, scoped, tag = 'output window, operand 0, single buffered']
    %8 = vsyncpa [#allocation3], 0
    %9 = vsyncpa [#allocation6], 0
    %10 = vsyncpa [#allocation4], 0
    // Predicated region
    $region2: #{tpu_custom_call.1} parent=1 // pred_check
      _
    $region3: #{tpu_custom_call.1} parent=1 // pred_check_branch
      %12 = sbr.rel (0) target = $region5
    $region4: #{tpu_custom_call.1} parent=1 // pred_region
      %s14 = ssub.s32 256, 256
      %15 = vsyncadd [#allocation3], %s14
      %s16 = sshll.u32 [#allocation2], 4
      %s17 = int_to_ptr.vmem [resolvable:$true] %s16
      %22 = dma.hbm_to_vmem [thread:$0]  %s0, 256, %s17, [#allocation3], 128, 128, 8
    $region5: #{tpu_custom_call.1} parent=1 // pred_fallthru
      _
    // Predicated region
    $region6: #{tpu_custom_call.1} parent=1 // pred_check
      _
    $region7: #{tpu_custom_call.1} parent=1 // pred_check_branch
      %24 = sbr.rel (0) target = $region9
    $region8: #{tpu_custom_call.1} parent=1 // pred_region
      %s26 = ssub.s32 256, 256
      %27 = vsyncadd [#allocation6], %s26
      %s28 = sshll.u32 [#allocation5], 4
      %s29 = int_to_ptr.vmem [resolvable:$true] %s28
      %34 = dma.hbm_to_vmem [thread:$0]  %s1, 256, %s29, [#allocation6], 128, 128, 8
    $region9: #{tpu_custom_call.1} parent=1 // pred_fallthru
      _
    // Predicated region
    $region10: #{tpu_custom_call.1} parent=1 // pred_check
      _
    $region11: #{tpu_custom_call.1} parent=1 // pred_check_branch
      %36 = sbr.rel (0) target = $region13
    $region12: #{tpu_custom_call.1} parent=1 // pred_region
      _
    $region13: #{tpu_custom_call.1} parent=1 // pred_fallthru
      _
    // Predicated region
    $region14: #{tpu_custom_call.1} parent=1 // pred_check
      _
    $region15: #{tpu_custom_call.1} parent=1 // pred_check_branch
      %38 = sbr.rel (0) target = $region17
    $region16: #{tpu_custom_call.1} parent=1 // pred_region
      %39 = dma.done [#allocation3], 256
    $region17: #{tpu_custom_call.1} parent=1 // pred_fallthru
      _
    // Predicated region
    $region18: #{tpu_custom_call.1} parent=1 // pred_check
      _
    $region19: #{tpu_custom_call.1} parent=1 // pred_check_branch
      %41 = sbr.rel (0) target = $region21
    $region20: #{tpu_custom_call.1} parent=1 // pred_region
      %42 = dma.done [#allocation6], 256
    $region21: #{tpu_custom_call.1} parent=1 // pred_fallthru
      _
    %v43 = vld [vmem:[#allocation2] sm:$0xff]
    %v44 = vld [vmem:[#allocation2 + $0x8] sm:$0xff]
    %v45 = vld [vmem:[#allocation5] sm:$0xff]
    %v46 = vld [vmem:[#allocation5 + $0x8] sm:$0xff]
    %v47 = vld [vmem:[%s2] sm:$0x1]
    %v49 = vlaneseq
    %v50 = vshrl.u32 %v49, 7
    %v51 = vsub.s32 0, %v50
    %v52 = vrot.slane %v47, %v51
    %vm54 = vcmask 261120
    %v56 = vsel %vm54, %v43, 0
    %v59 = vsel %vm54, %v44, 0
    %v62 = vsel %vm54, %v45, 0
    %v65 = vsel %vm54, %v46, 0
    %67 = vmatprep.subr.mxu0 0.0
    %68 = vmatpush1.xpose.msra.mxu0 %v62
    %69 = vmatprep.subr.mxu0 0.0
    %70 = vmatpush1.xpose.msra.mxu0 %v65
    %71 = vmatprep.subr.mxu0 0.0
    %72 = vmatpush1.xpose.msra.mxu0 0.0
    %73 = vmatprep.subr.mxu0 0.0
    %74 = vmatpush1.xpose.msra.mxu0 0.0
    %75 = vmatprep.subr.mxu0 0.0
    %76 = vmatpush1.xpose.msra.mxu0 0.0
    %77 = vmatprep.subr.mxu0 0.0
    %78 = vmatpush1.xpose.msra.mxu0 0.0
    %79 = vmatprep.subr.mxu0 0.0
    %80 = vmatpush1.xpose.msra.mxu0 0.0
    %81 = vmatprep.subr.mxu0 0.0
    %82 = vmatpush1.xpose.msra.mxu0 0.0
    %83 = vmatprep.subr.mxu0 0.0
    %84 = vmatpush1.xpose.msra.mxu0 0.0
    %85 = vmatprep.subr.mxu0 0.0
    %86 = vmatpush1.xpose.msra.mxu0 0.0
    %87 = vmatprep.subr.mxu0 0.0
    %88 = vmatpush1.xpose.msra.mxu0 0.0
    %89 = vmatprep.subr.mxu0 0.0
    %90 = vmatpush1.xpose.msra.mxu0 0.0
    %91 = vmatprep.subr.mxu0 0.0
    %92 = vmatpush1.xpose.msra.mxu0 0.0
    %93 = vmatprep.subr.mxu0 0.0
    %94 = vmatpush1.xpose.msra.mxu0 0.0
    %95 = vmatprep.subr.mxu0 0.0
    %96 = vmatpush1.xpose.msra.mxu0 0.0
    %97 = vmatprep.subr.mxu0 0.0
    %98 = vmatpush1.xpose.msra.mxu0 0.0
    %99 = vmatprep.subr.mxu0 0.0
    %100 = vmatpush1.xpose.msra.mxu0 0.0
    %101 = vmatprep.subr.mxu0 0.0
    %102 = vmatpush1.xpose.msra.mxu0 0.0
    %103 = vmatprep.subr.mxu0 0.0
    %104 = vmatpush1.xpose.msra.mxu0 0.0
    %105 = vmatprep.subr.mxu0 0.0
    %106 = vmatpush1.xpose.msra.mxu0 0.0
    %107 = vmatprep.subr.mxu0 0.0
    %108 = vmatpush1.xpose.msra.mxu0 0.0
    %109 = vmatprep.subr.mxu0 0.0
    %110 = vmatpush1.xpose.msra.mxu0 0.0
    %111 = vmatprep.subr.mxu0 0.0
    %112 = vmatpush1.xpose.msra.mxu0 0.0
    %113 = vmatprep.subr.mxu0 0.0
    %114 = vmatpush1.xpose.msra.mxu0 0.0
    %115 = vmatprep.subr.mxu0 0.0
    %116 = vmatpush1.xpose.msra.mxu0 0.0
    %117 = vmatprep.subr.mxu0 0.0
    %118 = vmatpush1.xpose.msra.mxu0 0.0
    %119 = vmatprep.subr.mxu0 0.0
    %120 = vmatpush1.xpose.msra.mxu0 0.0
    %121 = vmatprep.subr.mxu0 0.0
    %122 = vmatpush1.xpose.msra.mxu0 0.0
    %123 = vmatprep.subr.mxu0 0.0
    %124 = vmatpush1.xpose.msra.mxu0 0.0
    %125 = vmatprep.subr.mxu0 0.0
    %126 = vmatpush1.xpose.msra.mxu0 0.0
    %127 = vmatprep.subr.mxu0 0.0
    %128 = vmatpush1.xpose.msra.mxu0 0.0
    %129 = vmatprep.subr.mxu0 0.0
    %130 = vmatpush1.xpose.msra.mxu0 0.0
    %131 = vmatprep.mubr.f32.mxu0 0.0
    %132 = vmatmul.mubr.f32.gmra.mrb[0].mxu0 %v56
    %v133 = vpop.f32.mrb[0].mxu0
    %v134 = vadd.f32 %v52, %v133
    %v135 = vpop.f32.mrb[0].mxu0
    %136 = vmatprep.mubr.f32.mxu0 0.0
    %137 = vmatmul.mubr.f32.gmra.mrb[0].mxu0 %v59
    %v138 = vpop.f32.mrb[0].mxu0
    %v139 = vadd.f32 %v52, %v138
    %v140 = vpop.f32.mrb[0].mxu0
    %141 = vdwg.mxu0
    %vm142 = vcmask 130048
    %v143 = vsel %vm142, %v134, -inf
    %144 = vmax.xlane.f32.xlu0 %v143
    %v145 = vpop.xlane.xlu0 %144
    %v146 = vsel %vm142, %v139, -inf
    %147 = vmax.xlane.f32.xlu0 %v146
    %v148 = vpop.xlane.xlu0 %147
    %v149 = vsub.f32 %v134, %v145
    %v150 = vsub.f32 %v139, %v148
    %v151 = vmul.f32 %v149, 1.442695
    %v152 = vpow.pop %v151
    %v153 = vmul.f32 %v150, 1.442695
    %v154 = vpow.pop %v153
    %v155 = vsel %vm142, %v152, 0.0
    %156 = vadd.xlane.f32.xlu0 %v155
    %v157 = vpop.xlane.xlu0 %156
    %v158 = vsel %vm142, %v154, 0.0
    %159 = vadd.xlane.f32.xlu0 %v158
    %v160 = vpop.xlane.xlu0 %159
    %v161 = vmul.f32 %v157, 8.0
    %v162 = vmul.f32 %v160, 8.0
    %v163 = vrcp.pop %v161
    %v164 = vrcp.pop %v162
    %v165 = vmul.f32 %v152, %v163
    %v166 = vmul.f32 %v154, %v164
    %v167 = vsel %vm142, %v165, 0.0
    %v168 = vrot.slane %v167, 4
    %v169 = vadd.f32 %v167, %v168
    %v170 = vrot.slane %v169, 2
    %v171 = vadd.f32 %v169, %v170
    %v172 = vrot.slane %v171, 1
    %v173 = vadd.f32 %v171, %v172
    %v174 = vsel %vm142, %v166, 0.0
    %v175 = vrot.slane %v174, 4
    %v176 = vadd.f32 %v174, %v175
    %v177 = vrot.slane %v176, 2
    %v178 = vadd.f32 %v176, %v177
    %v179 = vrot.slane %v178, 1
    %v180 = vadd.f32 %v178, %v179
    %v181 = vlog2.pop %v173
    %v182 = vmul.f32 %v181, 0.6931472
    %v183 = vlog2.pop %v180
    %v184 = vmul.f32 %v183, 0.6931472
    %vm187 = vcmask 1041409
    %v188 = vsel %vm187, %v184, %v182
    %vm190 = vcmask 123904
    %191 = vst.msk [vmem:[#allocation7] sm:$0x3] %vm190, %v188
    %v194 = vsel %vm187, %v180, %v173
    %s196 = scalar_lea.vmem [#allocation7], 2
    %197 = vst.msk [vmem:[%s196] sm:$0x3] %vm190, %v194
    // Predicated region
    $region22: #{tpu_custom_call.1} parent=1 // pred_check
      _
    $region23: #{tpu_custom_call.1} parent=1 // pred_check_branch
      %199 = sbr.rel (0) target = $region25
    $region24: #{tpu_custom_call.1} parent=1 // pred_region
      %s201 = ssub.s32 64, 64
      %202 = vsyncadd [#allocation4], %s201
      %s203 = sshll.u32 [#allocation7], 4
      %s204 = int_to_ptr.vmem [resolvable:$true] %s203
      %209 = dma.vmem_to_hbm [thread:$0]  %s204, 64, %s3, [#allocation4], 32, 32, 2
    $region25: #{tpu_custom_call.1} parent=1 // pred_fallthru
      _
    // Predicated region
    $region26: #{tpu_custom_call.1} parent=1 // pred_check
      _
    $region27: #{tpu_custom_call.1} parent=1 // pred_check_branch
      %211 = sbr.rel (0) target = $region29
    $region28: #{tpu_custom_call.1} parent=1 // pred_region
      %212 = dma.done [#allocation4], 64
    $region29: #{tpu_custom_call.1} parent=1 // pred_fallthru
      _
    %213 = vsyncpa [#allocation3], 1
    %214 = vsyncpa [#allocation6], 1
    %215 = vsyncpa [#allocation4], 1

</llo_original>
